<compile_context>
chip_gen: v7x
topology: tpu7x:2x2x1
jax: 0.10.0
libtpu: 0.0.40
codegen_flags: <defaults>
</compile_context>

<pallas_src>
import functools

import jax
import jax.numpy as jnp
from jax.experimental import pallas as pl
from jax.experimental.pallas import tpu as pltpu


# ----------------------------------------------------------------------------
# Kernels
# ----------------------------------------------------------------------------
def _rowtile_matmul_kernel(x_ref, w_ref, b_ref, o_ref):
    # x_ref: (TM, K)  w_ref: (K, N)  b_ref: (1, N)  o_ref: (TM, N)
    acc = jnp.dot(x_ref[...], w_ref[...], preferred_element_type=jnp.float32)
    o_ref[...] = (acc + b_ref[...]).astype(o_ref.dtype)


def _channel_block_kernel(x_ref, w_ref, b_ref, o_ref):
    # x_ref: (C, B, L)  w_ref: (C, L, L)  b_ref: (C, 1, L)  o_ref: (C, B, L)
    acc = jnp.einsum(
        "cbl,clh->cbh", x_ref[...], w_ref[...],
        preferred_element_type=jnp.float32,
    )
    o_ref[...] = (acc + b_ref[...]).astype(o_ref.dtype)


# ----------------------------------------------------------------------------
# Tiling helpers (VMEM-budget aware; budget safe for v5e/v6e/v7x defaults)
# ----------------------------------------------------------------------------
_VMEM_BUDGET_BYTES = 10 * 1024 * 1024


def _choose_row_tile(M, K, N, itemsize):
    if M <= 512:
        return M  # full-extent block is always layout-legal
    fixed = 2 * (K * N + N) * itemsize            # double-buffered weight + bias
    avail = max(_VMEM_BUDGET_BYTES - fixed, 0)
    tm = avail // (2 * (K + N) * itemsize)        # double-buffered x + out rows
    tm = (tm // 128) * 128
    return int(max(128, min(512, tm)))


def _choose_channel_block(B, L, D, itemsize):
    per_c = 2 * (2 * B * L + L * L + L) * itemsize  # double-buffered x, out, w, b
    c = _VMEM_BUDGET_BYTES // max(per_c, 1)
    return int(max(1, min(D, c)))


# ----------------------------------------------------------------------------
# Row-tiled matmul wrapper (used by shared mode and block-diag individual mode)
# ----------------------------------------------------------------------------
def _rowtile_matmul(x_rows, weight, bias_row):
    M, K = x_rows.shape
    _, N = weight.shape
    itemsize = jnp.dtype(x_rows.dtype).itemsize
    tm = _choose_row_tile(M, K, N, itemsize)
    grid_m = pl.cdiv(M, tm)

    cost = pl.CostEstimate(
        flops=2 * M * K * N,
        transcendentals=0,
        bytes_accessed=(M * K + K * N + N + M * N) * itemsize,
    )

    return pl.pallas_call(
        _rowtile_matmul_kernel,
        out_shape=jax.ShapeDtypeStruct((M, N), x_rows.dtype),
        grid_spec=pltpu.PrefetchScalarGridSpec(
            num_scalar_prefetch=0,
            grid=(grid_m,),
            in_specs=[
                pl.BlockSpec((tm, K), lambda i: (i, 0)),   # x row tile
                pl.BlockSpec((K, N), lambda i: (0, 0)),    # weight (resident)
                pl.BlockSpec((1, N), lambda i: (0, 0)),    # bias (resident)
            ],
            out_specs=pl.BlockSpec((tm, N), lambda i: (i, 0)),
        ),
        compiler_params=pltpu.CompilerParams(
            dimension_semantics=("parallel",),
        ),
        cost_estimate=cost,
    )(x_rows, weight, bias_row)


# ----------------------------------------------------------------------------
# Forward
# ----------------------------------------------------------------------------
@functools.partial(jax.jit, static_argnames=("mode", "individual_impl"))
def dlinear_forward(x, weight, bias, mode="individual", individual_impl="auto"):
    """Pallas implementation of CustomDLinearModel.forward.

    x: (B, L, D) float32
    individual: weight (D, L, L), bias (D, L)
    shared:     weight (L, L),    bias (L,)
    returns (B, L, D)
    """
    B, L, D = x.shape
    itemsize = jnp.dtype(x.dtype).itemsize

    # TODO(synk): dropout>0 (training-time Bernoulli mask) not implemented; the
    # module defaults to dropout=0.0 which is an identity at inference.

    if mode == "individual":
        use_block_diag = (individual_impl == "block_diag") or (
            individual_impl == "auto" and D * L <= 512
        )
        if use_block_diag:
            # One lane-dense matmul with a block-diagonal weight.
            eye = jnp.eye(D, dtype=weight.dtype)
            w_bd = (eye[:, None, :, None] * weight[:, :, None, :]).reshape(D * L, D * L)
            x_rows = jnp.transpose(x, (0, 2, 1)).reshape(B, D * L)
            out_rows = _rowtile_matmul(x_rows, w_bd, bias.reshape(1, D * L))
            return jnp.transpose(out_rows.reshape(B, D, L), (0, 2, 1))

        # Channel-blocked path: C channels per grid step.
        C = _choose_channel_block(B, L, D, itemsize)
        grid_d = pl.cdiv(D, C)
        x_dbl = jnp.transpose(x, (2, 0, 1))          # (D, B, L)
        bias_3d = bias.reshape(D, 1, L)

        cost = pl.CostEstimate(
            flops=2 * B * L * L * D,
            transcendentals=0,
            bytes_accessed=(2 * B * L * D + D * L * L + D * L) * itemsize,
        )

        out_dbl = pl.pallas_call(
            _channel_block_kernel,
            out_shape=jax.ShapeDtypeStruct((D, B, L), x.dtype),
            grid_spec=pltpu.PrefetchScalarGridSpec(
                num_scalar_prefetch=0,
                grid=(grid_d,),
                in_specs=[
                    pl.BlockSpec((C, B, L), lambda d: (d, 0, 0)),   # x channels
                    pl.BlockSpec((C, L, L), lambda d: (d, 0, 0)),   # weights
                    pl.BlockSpec((C, 1, L), lambda d: (d, 0, 0)),   # bias (same block)
                ],
                out_specs=pl.BlockSpec((C, B, L), lambda d: (d, 0, 0)),
            ),
            compiler_params=pltpu.CompilerParams(
                dimension_semantics=("parallel",),
            ),
            cost_estimate=cost,
        )(x_dbl, weight, bias_3d)
        return jnp.transpose(out_dbl, (1, 2, 0))     # (B, L, D)

    elif mode == "shared":
        # torch: x.transpose(1,2).reshape(B*D, L) @ W + b, then back to (B, L, D)
        x_rows = jnp.transpose(x, (0, 2, 1)).reshape(B * D, L)
        out_rows = _rowtile_matmul(x_rows, weight, bias.reshape(1, L))
        return jnp.transpose(out_rows.reshape(B, D, L), (0, 2, 1))

    else:
        raise ValueError("mode must be either 'individual' or 'shared'")


# ----------------------------------------------------------------------------
# Reference (plain JAX) for verification
# ----------------------------------------------------------------------------
def dlinear_reference(x, weight, bias, mode="individual"):
    if mode == "individual":
        out = jnp.einsum("bld,dlh->bdh", x, weight) + bias[None]
        return jnp.transpose(out, (0, 2, 1))
    else:
        B, L, D = x.shape
        xr = jnp.transpose(x, (0, 2, 1)).reshape(B * D, L)
        out = xr @ weight + bias
        return jnp.transpose(out.reshape(B, D, L), (0, 2, 1))


# ----------------------------------------------------------------------------
# Main
# ----------------------------------------------------------------------------
if __name__ == "__main__":
    # Small shapes consistent with the module's forward: x is (B, L, D)
    B = 2   # batch
    L = 8   # input_chunk_length (= forecast horizon)
    D = 4   # input_dim (channels)

    key = jax.random.PRNGKey(0)
    kx, kw_ind, kw_sh = jax.random.split(key, 3)

    x = jax.random.normal(kx, (B, L, D), dtype=jnp.float32)

    # Deterministic parameter init (mimics torch.randn / torch.zeros).
    w_ind = jax.random.normal(kw_ind, (D, L, L), dtype=jnp.float32)
    b_ind = jnp.zeros((D, L), dtype=jnp.float32)

    w_sh = jax.random.normal(kw_sh, (L, L), dtype=jnp.float32)
    b_sh = jnp.zeros((L,), dtype=jnp.float32)

    ref_ind = dlinear_reference(x, w_ind, b_ind, mode="individual")
    ref_sh = dlinear_reference(x, w_sh, b_sh, mode="shared")

    # ---- individual mode: auto (block-diagonal single-matmul path) ----
    out_ind = dlinear_forward(x, w_ind, b_ind, mode="individual")
    out_ind = jax.block_until_ready(out_ind)
    assert out_ind.shape == (B, L, D)
    assert jnp.allclose(out_ind, ref_ind, atol=1e-5, rtol=1e-5)

    # ---- individual mode: forced channel-blocked kernel path ----
    out_ind_cb = dlinear_forward(
        x, w_ind, b_ind, mode="individual", individual_impl="channel_block"
    )
    out_ind_cb = jax.block_until_ready(out_ind_cb)
    assert out_ind_cb.shape == (B, L, D)
    assert jnp.allclose(out_ind_cb, ref_ind, atol=1e-5, rtol=1e-5)

    # ---- shared mode (row-tiled matmul) ----
    out_sh = dlinear_forward(x, w_sh, b_sh, mode="shared")
    out_sh = jax.block_until_ready(out_sh)
    assert out_sh.shape == (B, L, D)
    assert jnp.allclose(out_sh, ref_sh, atol=1e-5, rtol=1e-5)

    print("KERNEL_OK")
</pallas_src>

<mosaic_0001>
module attributes {stable_mosaic.version = 11 : i64} {
  func.func @_rowtile_matmul_kernel(%arg0: i32, %arg1: memref<2x32xf32, #tpu.memory_space<vmem>>, %arg2: memref<32x32xf32, #tpu.memory_space<vmem>>, %arg3: memref<1x32xf32, #tpu.memory_space<vmem>>, %arg4: memref<2x32xf32, #tpu.memory_space<vmem>>) attributes {dimension_semantics = [#tpu.dimension_semantics<parallel>], iteration_bounds = array<i64: 1>, scalar_prefetch = 0 : i64, scratch_operands = 0 : i64, tpu.core_type = #tpu.core_type<tc>, window_params = [{transform_indices = @transform_0, window_bounds = array<i64: 2, 32>}, {pipeline_mode = #tpu.pipeline_mode<synchronous>, transform_indices = @transform_1, window_bounds = array<i64: 32, 32>}, {pipeline_mode = #tpu.pipeline_mode<synchronous>, transform_indices = @transform_2, window_bounds = array<i64: 1, 32>}, {transform_indices = @transform_3, window_bounds = array<i64: 2, 32>}]} {
    %c0 = arith.constant 0 : index
    %c0_0 = arith.constant 0 : index
    %0 = vector.load %arg1[%c0, %c0_0] : memref<2x32xf32, #tpu.memory_space<vmem>>, vector<2x32xf32>
    %c0_1 = arith.constant 0 : index
    %c0_2 = arith.constant 0 : index
    %1 = vector.load %arg2[%c0_1, %c0_2] : memref<32x32xf32, #tpu.memory_space<vmem>>, vector<32x32xf32>
    %cst = arith.constant dense<0.000000e+00> : vector<2x32xf32>
    %2 = tpu.matmul %0, %1, %cst {dimension_numbers = #tpu.dot_dimension_numbers<[1], [0], [0], [1], [0, 0, 1, 1], [], []>} : vector<2x32xf32>, vector<32x32xf32>, vector<2x32xf32> -> vector<2x32xf32>
    %c0_3 = arith.constant 0 : index
    %c0_4 = arith.constant 0 : index
    %3 = vector.load %arg3[%c0_3, %c0_4] : memref<1x32xf32, #tpu.memory_space<vmem>>, vector<1x32xf32>
    %4 = vector.broadcast %3 : vector<1x32xf32> to vector<2x32xf32>
    %5 = arith.addf %2, %4 : vector<2x32xf32>
    %c0_5 = arith.constant 0 : index
    %c0_6 = arith.constant 0 : index
    %6 = vector.load %arg4[%c0_5, %c0_6] : memref<2x32xf32, #tpu.memory_space<vmem>>, vector<2x32xf32>
    tpu.vector_store %arg4[%c0_5, %c0_6], %5 {strides = array<i32>} : memref<2x32xf32, #tpu.memory_space<vmem>>, vector<2x32xf32>,
    return
  }
  func.func @transform_0(%arg0: i32) -> (i32, i32) {
    %c0_i32 = arith.constant 0 : i32
    %c0_i32_0 = arith.constant 0 : i32
    return %arg0, %c0_i32 : i32, i32
  }
  func.func @transform_1(%arg0: i32) -> (i32, i32) {
    %c0_i32 = arith.constant 0 : i32
    %c0_i32_0 = arith.constant 0 : i32
    %c0_i32_1 = arith.constant 0 : i32
    return %c0_i32, %c0_i32_0 : i32, i32
  }
  func.func @transform_2(%arg0: i32) -> (i32, i32) {
    %c0_i32 = arith.constant 0 : i32
    %c0_i32_0 = arith.constant 0 : i32
    %c0_i32_1 = arith.constant 0 : i32
    return %c0_i32, %c0_i32_0 : i32, i32
  }
  func.func @transform_3(%arg0: i32) -> (i32, i32) {
    %c0_i32 = arith.constant 0 : i32
    %c0_i32_0 = arith.constant 0 : i32
    return %arg0, %c0_i32 : i32, i32
  }
}

</mosaic_0001>

<llo_original>
// kernel: dlinear_forward.1
$region0: #{dlinear_forward.1}
  #allocation0 [shape = 'u32[]', space=smem, size = 0x4, offset = 0x4, fixed_abs, tag = 'smem constant byte address 0x4 - core index']
  #allocation1 [shape = 'u32[144,128]{1,0:T(1,128)}', space=vmem, size = 0x12000, scoped, tag = 'internal scratch']
  %s0 = inlined_call_operand.vmem [shape: f32[2,32], index: 0, kind: input, shape index: {}]
  %s1 = inlined_call_operand.vmem [shape: f32[32,32], index: 1, kind: input, shape index: {}]
  %s2 = inlined_call_operand.vmem [shape: f32[1,32], index: 2, kind: input, shape index: {}]
  %s3 = inlined_call_operand.vmem [shape: f32[2,32], index: 3, kind: output, shape index: {}]
  %s4 = sld [smem:[#allocation0]]
  $region22: #{dlinear_forward.1} parent=0
    _
  %s6 = ssub.s32 1, %s4
  %s7 = scalar_select 0, %s6, %s4
  // Predicated region
  $region2: #{dlinear_forward.1} parent=0 // pred_check
    _
  $region3: #{dlinear_forward.1} parent=0 // pred_check_branch
    %9 = sbr.rel (0) target = $region5
  $region4: #{dlinear_forward.1} parent=0 // pred_region
    _
  $region5: #{dlinear_forward.1} parent=0 // pred_fallthru
    _
  // Predicated region
  $region6: #{dlinear_forward.1} parent=0 // pred_check
    _
  $region7: #{dlinear_forward.1} parent=0 // pred_check_branch
    %11 = sbr.rel (0) target = $region9
  $region8: #{dlinear_forward.1} parent=0 // pred_region
    _
  $region9: #{dlinear_forward.1} parent=0 // pred_fallthru
    _
  // Predicated region
  $region10: #{dlinear_forward.1} parent=0 // pred_check
    _
  $region11: #{dlinear_forward.1} parent=0 // pred_check_branch
    %13 = sbr.rel (0) target = $region13
  $region12: #{dlinear_forward.1} parent=0 // pred_region
    _
  $region13: #{dlinear_forward.1} parent=0 // pred_fallthru
    _
  %v14 = vld [vmem:[%s0] sm:$0x3]
  %v15 = vld [vmem:[%s1] sm:$0xff]
  %v16 = vld [vmem:[%s1 + $0x8] sm:$0xff]
  %v17 = vld [vmem:[%s1 + $0x10] sm:$0xff]
  %v18 = vld [vmem:[%s1 + $0x18] sm:$0xff]
  %v19 = vld [vmem:[%s2] sm:$0x1]
  %v21 = vlaneseq
  %v22 = vshrl.u32 %v21, 7
  %v23 = vsub.s32 0, %v22
  %v24 = vrot.slane %v19, %v23
  %vm26 = vcmask 261120
  %v28 = vsel %vm26, %v14, 0
  %30 = vmatprep.subr.mxu0 0.0
  %31 = vmatpush1.msra.mxu0 %v15
  %32 = vmatprep.subr.mxu0 0.0
  %33 = vmatpush1.msra.mxu0 %v16
  %34 = vmatprep.subr.mxu0 0.0
  %35 = vmatpush1.msra.mxu0 %v17
  %36 = vmatprep.subr.mxu0 0.0
  %37 = vmatpush1.msra.mxu0 %v18
  %38 = vmatprep.subr.mxu0 0.0
  %39 = vmatpush1.msra.mxu0 0.0
  %40 = vmatprep.subr.mxu0 0.0
  %41 = vmatpush1.msra.mxu0 0.0
  %42 = vmatprep.subr.mxu0 0.0
  %43 = vmatpush1.msra.mxu0 0.0
  %44 = vmatprep.subr.mxu0 0.0
  %45 = vmatpush1.msra.mxu0 0.0
  %46 = vmatprep.subr.mxu0 0.0
  %47 = vmatpush1.msra.mxu0 0.0
  %48 = vmatprep.subr.mxu0 0.0
  %49 = vmatpush1.msra.mxu0 0.0
  %50 = vmatprep.subr.mxu0 0.0
  %51 = vmatpush1.msra.mxu0 0.0
  %52 = vmatprep.subr.mxu0 0.0
  %53 = vmatpush1.msra.mxu0 0.0
  %54 = vmatprep.subr.mxu0 0.0
  %55 = vmatpush1.msra.mxu0 0.0
  %56 = vmatprep.subr.mxu0 0.0
  %57 = vmatpush1.msra.mxu0 0.0
  %58 = vmatprep.subr.mxu0 0.0
  %59 = vmatpush1.msra.mxu0 0.0
  %60 = vmatprep.subr.mxu0 0.0
  %61 = vmatpush1.msra.mxu0 0.0
  %62 = vmatprep.subr.mxu0 0.0
  %63 = vmatpush1.msra.mxu0 0.0
  %64 = vmatprep.subr.mxu0 0.0
  %65 = vmatpush1.msra.mxu0 0.0
  %66 = vmatprep.subr.mxu0 0.0
  %67 = vmatpush1.msra.mxu0 0.0
  %68 = vmatprep.subr.mxu0 0.0
  %69 = vmatpush1.msra.mxu0 0.0
  %70 = vmatprep.subr.mxu0 0.0
  %71 = vmatpush1.msra.mxu0 0.0
  %72 = vmatprep.subr.mxu0 0.0
  %73 = vmatpush1.msra.mxu0 0.0
  %74 = vmatprep.subr.mxu0 0.0
  %75 = vmatpush1.msra.mxu0 0.0
  %76 = vmatprep.subr.mxu0 0.0
  %77 = vmatpush1.msra.mxu0 0.0
  %78 = vmatprep.subr.mxu0 0.0
  %79 = vmatpush1.msra.mxu0 0.0
  %80 = vmatprep.subr.mxu0 0.0
  %81 = vmatpush1.msra.mxu0 0.0
  %82 = vmatprep.subr.mxu0 0.0
  %83 = vmatpush1.msra.mxu0 0.0
  %84 = vmatprep.subr.mxu0 0.0
  %85 = vmatpush1.msra.mxu0 0.0
  %86 = vmatprep.subr.mxu0 0.0
  %87 = vmatpush1.msra.mxu0 0.0
  %88 = vmatprep.subr.mxu0 0.0
  %89 = vmatpush1.msra.mxu0 0.0
  %90 = vmatprep.subr.mxu0 0.0
  %91 = vmatpush1.msra.mxu0 0.0
  %92 = vmatprep.subr.mxu0 0.0
  %93 = vmatpush1.msra.mxu0 0.0
  %94 = vmatprep.mubr.f32.mxu0 0.0
  %95 = vmatmul.mubr.f32.gmra.mrb[0].mxu0 %v28
  %v96 = vpop.f32.mrb[0].mxu0
  %v97 = vadd.f32 %v24, %v96
  %v98 = vpop.f32.mrb[0].mxu0
  %99 = vdwg.mxu0
  %vm100 = vcmask 254976
  %101 = vst.msk [vmem:[%s3] sm:$0x3] %vm100, %v97
  // Predicated region
  $region14: #{dlinear_forward.1} parent=0 // pred_check
    _
  $region15: #{dlinear_forward.1} parent=0 // pred_check_branch
    %103 = sbr.rel (0) target = $region17
  $region16: #{dlinear_forward.1} parent=0 // pred_region
    _
  $region17: #{dlinear_forward.1} parent=0 // pred_fallthru
    _
  // Predicated region
  $region18: #{dlinear_forward.1} parent=0 // pred_check
    _
  $region19: #{dlinear_forward.1} parent=0 // pred_check_branch
    %105 = sbr.rel (0) target = $region21
  $region20: #{dlinear_forward.1} parent=0 // pred_region
    _
  $region21: #{dlinear_forward.1} parent=0 // pred_fallthru
    _

</llo_original>
